<compile_context>
chip_gen: v5e
topology: v5e:2x2
jax: 0.10.0
libtpu: 0.0.40
codegen_flags: <defaults>
</compile_context>

<pallas_src>
import jax
import jax.numpy as jnp
import numpy as np
from jax import lax
from jax.experimental import pallas as pl
from jax.experimental.pallas import tpu as pltpu

C = 3            # channels (Conv2d(3, 3, kernel_size=3, padding='same'))
H = 16
W = 16
HW = H * W
K = 3            # conv kernel size
KK = K * K
STK_ROWS = 32    # 27 tap rows + 1 bias row + 4 zero-pad rows (sublane-group aligned)
INV_SQRT_C = float(C) ** -0.5


def _denoise_kernel(x_ref, w_ref, m_ref, o_ref, stk_ref):
    # x_ref  : (1, C, HW)       input image, spatially flattened (lane-dense)
    # w_ref  : (C, STK_ROWS)    packed conv weights [w_taps | bias | zeros]
    # m_ref  : (KK, HW)         per-tap boundary masks (grid-invariant constant)
    # o_ref  : (1, C, HW)       output (residual added)
    # stk_ref: (STK_ROWS, HW)   VMEM scratch: [x; 1] staging, then the stacked conv operand
    x = x_ref[0]                                                  # (C, HW)

    # ---------------- non-local attention (softmax over keys) ----------------
    xs = x * INV_SQRT_C                                           # fold 1/sqrt(C) into one operand
    # s[i, k] = sum_c xs[c, i] * x[c, k]  -> (HW, HW), no explicit transpose
    s = lax.dot_general(xs, x, (((0,), (0,)), ((), ())),
                        preferred_element_type=jnp.float32)
    # Global scalar shift: softmax is shift-invariant, so this is mathematically identical
    # to the per-row max (here the per-row gap is bounded far below the exp underflow range).
    m = jnp.max(s)
    e = jnp.exp(s - m)                                            # unnormalized probs (HW, HW)

    # Fused PV + denominator: xa = [x; ones], one matmul gives fnum rows and the row sums.
    stk_ref[pl.ds(0, C), :] = x
    stk_ref[pl.ds(C, 1), :] = jnp.ones((1, HW), jnp.float32)
    xa = stk_ref[pl.ds(0, C + 1), :]                              # (C+1, HW)
    fd = lax.dot_general(xa, e, (((1,), (1,)), ((), ())),
                         preferred_element_type=jnp.float32)      # (C+1, HW)
    fnum = fd[0:C, :]                                             # (C, HW) unnormalized f
    denom = fd[C:C + 1, :]                                        # (1, HW) softmax row sums
    f = fnum * pl.reciprocal(denom)                               # deferred normalization (EUP)

    # ------ 3x3 SAME conv (+bias) as ONE (C, 32)x(32, HW) matmul in flat layout ------
    for ky in range(K):
        for kx in range(K):
            tap = ky * K + kx
            off = (ky - 1) * W + (kx - 1)                         # flat-index shift of this tap
            if off == 0:
                shifted = f
            else:
                # shifted[c, p] = f[c, p + off]; wrap-around only lands on masked slots
                shifted = pltpu.roll(f, shift=(-off) % HW, axis=1)
            if tap != (KK - 1) // 2:                              # center tap needs no mask
                shifted = shifted * m_ref[pl.ds(tap, 1), :]       # zero-pad boundary handling
            stk_ref[pl.ds(C * tap, C), :] = shifted
    stk_ref[pl.ds(C * KK, 1), :] = jnp.ones((1, HW), jnp.float32)          # bias row
    stk_ref[pl.ds(C * KK + 1, STK_ROWS - C * KK - 1), :] = jnp.zeros(
        (STK_ROWS - C * KK - 1, HW), jnp.float32)                          # zero pad rows
    # conv[co, p] = sum_k w_packed[co, k] * stacked[k, p]  (bias included via the ones row)
    conv = lax.dot_general(w_ref[...], stk_ref[...], (((1,), (0,)), ((), ())),
                           preferred_element_type=jnp.float32)    # (C, HW)

    o_ref[0] = x + conv                                           # residual


def prepare_params(w, b):
    """Hoisted, call-once parameter packing.

    w: (C, C, K, K) f32, b: (C,) f32
    -> w_packed: (C, STK_ROWS) with columns [tap*C + ci] = w[co, ci, ky, kx], col 27 = bias
    -> masks:    (KK, HW) f32 combined boundary masks per tap
    """
    wt = jnp.transpose(w, (0, 2, 3, 1)).reshape(C, KK * C)        # (co, (ky,kx,ci)) row-major
    w_packed = jnp.concatenate(
        [wt, b.reshape(C, 1),
         jnp.zeros((C, STK_ROWS - KK * C - 1), jnp.float32)], axis=1)      # (C, 32)

    pos = np.arange(HW)
    col = pos % W
    vm = [(pos >= W), np.ones(HW, bool), (pos < HW - W)]          # ky = 0, 1, 2
    hm = [(col != 0), np.ones(HW, bool), (col != W - 1)]          # kx = 0, 1, 2
    masks = np.stack([(vm[ky] & hm[kx]).astype(np.float32)
                      for ky in range(K) for kx in range(K)])      # (KK, HW)
    return w_packed, jnp.asarray(masks)


def denoising_model_forward(x, w_packed, masks):
    """x: (B, C, H, W) f32 -> (B, C, H, W) f32. w_packed/masks from prepare_params()."""
    B = x.shape[0]
    xf = x.reshape(B, C, HW)                                      # metadata-only reshape
    out = pl.pallas_call(
        _denoise_kernel,
        out_shape=jax.ShapeDtypeStruct((B, C, HW), jnp.float32),
        grid=(B,),
        in_specs=[
            pl.BlockSpec((1, C, HW), lambda i: (i, 0, 0)),
            pl.BlockSpec((C, STK_ROWS), lambda i: (0, 0)),        # grid-invariant, DMA'd once
            pl.BlockSpec((KK, HW), lambda i: (0, 0)),             # grid-invariant, DMA'd once
        ],
        out_specs=pl.BlockSpec((1, C, HW), lambda i: (i, 0, 0)),
        scratch_shapes=[pltpu.VMEM((STK_ROWS, HW), jnp.float32)],
        compiler_params=pltpu.CompilerParams(dimension_semantics=("parallel",)),
    )(xf, w_packed, masks)
    return out.reshape(B, C, H, W)                                # metadata-only reshape


def reference_forward(x, w, b):
    # Pure-JAX reference reproducing the PyTorch forward pass.
    B = x.shape[0]
    xf = x.reshape(B, C, HW)
    phi = jnp.transpose(xf, (0, 2, 1))
    s = jnp.einsum('bij,bjk->bik', phi, xf) / jnp.sqrt(jnp.float32(C))
    a = jax.nn.softmax(s, axis=2)
    f = jnp.einsum('bik,bkj->bij', a, phi)
    f = jnp.transpose(f, (0, 2, 1)).reshape(B, C, H, W)
    f1 = jax.lax.conv_general_dilated(
        f, w, window_strides=(1, 1), padding='SAME',
        dimension_numbers=('NCHW', 'OIHW', 'NCHW')) + b[None, :, None, None]
    return x + f1


if __name__ == "__main__":
    key = jax.random.PRNGKey(0)
    kx, kw, kb = jax.random.split(key, 3)
    # Deterministic synthetic parameters (Conv2d(3, 3, kernel_size=3) shapes).
    x = jax.random.normal(kx, (2, C, H, W), dtype=jnp.float32)
    w = jax.random.normal(kw, (C, C, K, K), dtype=jnp.float32) * 0.1
    b = jax.random.normal(kb, (C,), dtype=jnp.float32) * 0.1

    w_packed, masks = prepare_params(w, b)                        # computed once (hoisted)
    out = jax.block_until_ready(denoising_model_forward(x, w_packed, masks))

    ref = reference_forward(x, w, b)
    assert out.shape == (2, C, H, W)
    err = float(jnp.max(jnp.abs(out - ref)))
    assert jnp.allclose(out, ref, atol=1e-3, rtol=1e-3), err
    print("KERNEL_OK")
</pallas_src>

<mosaic_0001>
module attributes {stable_mosaic.version = 11 : i64} {
  func.func @_denoise_kernel(%arg0: i32, %arg1: memref<1x3x256xf32, #tpu.memory_space<vmem>>, %arg2: memref<3x32xf32, #tpu.memory_space<vmem>>, %arg3: memref<9x256xf32, #tpu.memory_space<vmem>>, %arg4: memref<1x3x256xf32, #tpu.memory_space<vmem>>, %arg5: memref<32x256xf32, #tpu.memory_space<vmem>>) attributes {dimension_semantics = [#tpu.dimension_semantics<parallel>], iteration_bounds = array<i64: 2>, scalar_prefetch = 0 : i64, scratch_operands = 1 : i64, tpu.core_type = #tpu.core_type<tc>, window_params = [{transform_indices = @transform_0, window_bounds = array<i64: 1, 3, 256>}, {pipeline_mode = #tpu.pipeline_mode<synchronous>, transform_indices = @transform_1, window_bounds = array<i64: 3, 32>}, {pipeline_mode = #tpu.pipeline_mode<synchronous>, transform_indices = @transform_2, window_bounds = array<i64: 9, 256>}, {transform_indices = @transform_3, window_bounds = array<i64: 1, 3, 256>}]} {
    %c0 = arith.constant 0 : index
    %c0_0 = arith.constant 0 : index
    %c0_1 = arith.constant 0 : index
    %0 = vector.load %arg1[%c0, %c0_0, %c0_1] : memref<1x3x256xf32, #tpu.memory_space<vmem>>, vector<1x3x256xf32>
    %1 = vector.shape_cast %0 : vector<1x3x256xf32> to vector<3x256xf32>
    %cst = arith.constant 0.577350259 : f32
    %2 = vector.broadcast %cst : f32 to vector<3x256xf32>
    %3 = arith.mulf %1, %2 : vector<3x256xf32>
    %cst_2 = arith.constant dense<0.000000e+00> : vector<256x256xf32>
    %4 = tpu.matmul %3, %1, %cst_2 {dimension_numbers = #tpu.dot_dimension_numbers<[0], [0], [1], [1], [0, 1, 1, 1], [], []>} : vector<3x256xf32>, vector<3x256xf32>, vector<256x256xf32> -> vector<256x256xf32>
    %5 = vector.shape_cast %4 : vector<256x256xf32> to vector<1x256x256xf32>
    %cst_3 = arith.constant dense<0xFF800000> : vector<1xf32>
    %6 = vector.multi_reduction <maximumf>, %5, %cst_3 [1, 2] : vector<1x256x256xf32> to vector<1xf32>
    %7 = vector.shape_cast %6 : vector<1xf32> to vector<1x1x1xf32>
    %8 = vector.extract %7[0, 0, 0] : f32 from vector<1x1x1xf32>
    %9 = vector.broadcast %8 : f32 to vector<256x256xf32>
    %10 = arith.subf %4, %9 : vector<256x256xf32>
    %11 = math.exp %10 : vector<256x256xf32>
    %c0_4 = arith.constant 0 : index
    %c0_5 = arith.constant 0 : index
    %12 = vector.load %arg5[%c0_4, %c0_5] : memref<32x256xf32, #tpu.memory_space<vmem>>, vector<3x256xf32>
    tpu.vector_store %arg5[%c0_4, %c0_5], %1 {strides = array<i32>} : memref<32x256xf32, #tpu.memory_space<vmem>>, vector<3x256xf32>,
    %cst_6 = arith.constant 1.000000e+00 : f32
    %13 = vector.broadcast %cst_6 : f32 to vector<1x256xf32>
    %c3 = arith.constant 3 : index
    %c0_7 = arith.constant 0 : index
    %14 = vector.load %arg5[%c3, %c0_7] : memref<32x256xf32, #tpu.memory_space<vmem>>, vector<1x256xf32>
    tpu.vector_store %arg5[%c3, %c0_7], %13 {strides = array<i32>} : memref<32x256xf32, #tpu.memory_space<vmem>>, vector<1x256xf32>,
    %c0_8 = arith.constant 0 : index
    %c0_9 = arith.constant 0 : index
    %15 = vector.load %arg5[%c0_8, %c0_9] : memref<32x256xf32, #tpu.memory_space<vmem>>, vector<4x256xf32>
    %cst_10 = arith.constant dense<0.000000e+00> : vector<4x256xf32>
    %16 = tpu.matmul %15, %11, %cst_10 {dimension_numbers = #tpu.dot_dimension_numbers<[1], [1], [0], [0], [0, 0, 1, 0], [], []>} : vector<4x256xf32>, vector<256x256xf32>, vector<4x256xf32> -> vector<4x256xf32>
    %17 = vector.extract_strided_slice %16 {offsets = [0, 0], sizes = [3, 256], strides = [1, 1]} : vector<4x256xf32> to vector<3x256xf32>
    %18 = vector.extract_strided_slice %16 {offsets = [3, 0], sizes = [1, 256], strides = [1, 1]} : vector<4x256xf32> to vector<1x256xf32>
    %19 = tpu.reciprocal %18 : vector<1x256xf32> -> vector<1x256xf32>
    %20 = vector.broadcast %19 : vector<1x256xf32> to vector<3x256xf32>
    %21 = arith.mulf %17, %20 : vector<3x256xf32>
    %c17_i32 = arith.constant 17 : i32
    %22 = tpu.dynamic_rotate %21 by %c17_i32 dim 1 : vector<3x256xf32>, i32 -> vector<3x256xf32>
    %c0_11 = arith.constant 0 : index
    %c0_12 = arith.constant 0 : index
    %23 = vector.load %arg3[%c0_11, %c0_12] : memref<9x256xf32, #tpu.memory_space<vmem>>, vector<1x256xf32>
    %24 = vector.broadcast %23 : vector<1x256xf32> to vector<3x256xf32>
    %25 = arith.mulf %22, %24 : vector<3x256xf32>
    %c0_13 = arith.constant 0 : index
    %c0_14 = arith.constant 0 : index
    %26 = vector.load %arg5[%c0_13, %c0_14] : memref<32x256xf32, #tpu.memory_space<vmem>>, vector<3x256xf32>
    tpu.vector_store %arg5[%c0_13, %c0_14], %25 {strides = array<i32>} : memref<32x256xf32, #tpu.memory_space<vmem>>, vector<3x256xf32>,
    %c16_i32 = arith.constant 16 : i32
    %27 = tpu.dynamic_rotate %21 by %c16_i32 dim 1 : vector<3x256xf32>, i32 -> vector<3x256xf32>
    %c1 = arith.constant 1 : index
    %c0_15 = arith.constant 0 : index
    %28 = vector.load %arg3[%c1, %c0_15] : memref<9x256xf32, #tpu.memory_space<vmem>>, vector<1x256xf32>
    %29 = vector.broadcast %28 : vector<1x256xf32> to vector<3x256xf32>
    %30 = arith.mulf %27, %29 : vector<3x256xf32>
    %c3_16 = arith.constant 3 : index
    %c0_17 = arith.constant 0 : index
    %31 = vector.load %arg5[%c3_16, %c0_17] : memref<32x256xf32, #tpu.memory_space<vmem>>, vector<3x256xf32>
    tpu.vector_store %arg5[%c3_16, %c0_17], %30 {strides = array<i32>} : memref<32x256xf32, #tpu.memory_space<vmem>>, vector<3x256xf32>,
    %c15_i32 = arith.constant 15 : i32
    %32 = tpu.dynamic_rotate %21 by %c15_i32 dim 1 : vector<3x256xf32>, i32 -> vector<3x256xf32>
    %c2 = arith.constant 2 : index
    %c0_18 = arith.constant 0 : index
    %33 = vector.load %arg3[%c2, %c0_18] : memref<9x256xf32, #tpu.memory_space<vmem>>, vector<1x256xf32>
    %34 = vector.broadcast %33 : vector<1x256xf32> to vector<3x256xf32>
    %35 = arith.mulf %32, %34 : vector<3x256xf32>
    %c6 = arith.constant 6 : index
    %c0_19 = arith.constant 0 : index
    %36 = vector.load %arg5[%c6, %c0_19] : memref<32x256xf32, #tpu.memory_space<vmem>>, vector<3x256xf32>
    tpu.vector_store %arg5[%c6, %c0_19], %35 {strides = array<i32>} : memref<32x256xf32, #tpu.memory_space<vmem>>, vector<3x256xf32>,
    %c1_i32 = arith.constant 1 : i32
    %37 = tpu.dynamic_rotate %21 by %c1_i32 dim 1 : vector<3x256xf32>, i32 -> vector<3x256xf32>
    %c3_20 = arith.constant 3 : index
    %c0_21 = arith.constant 0 : index
    %38 = vector.load %arg3[%c3_20, %c0_21] : memref<9x256xf32, #tpu.memory_space<vmem>>, vector<1x256xf32>
    %39 = vector.broadcast %38 : vector<1x256xf32> to vector<3x256xf32>
    %40 = arith.mulf %37, %39 : vector<3x256xf32>
    %c9 = arith.constant 9 : index
    %c0_22 = arith.constant 0 : index
    %41 = vector.load %arg5[%c9, %c0_22] : memref<32x256xf32, #tpu.memory_space<vmem>>, vector<3x256xf32>
    tpu.vector_store %arg5[%c9, %c0_22], %40 {strides = array<i32>} : memref<32x256xf32, #tpu.memory_space<vmem>>, vector<3x256xf32>,
    %c12 = arith.constant 12 : index
    %c0_23 = arith.constant 0 : index
    %42 = vector.load %arg5[%c12, %c0_23] : memref<32x256xf32, #tpu.memory_space<vmem>>, vector<3x256xf32>
    tpu.vector_store %arg5[%c12, %c0_23], %21 {strides = array<i32>} : memref<32x256xf32, #tpu.memory_space<vmem>>, vector<3x256xf32>,
    %c255_i32 = arith.constant 255 : i32
    %43 = tpu.dynamic_rotate %21 by %c255_i32 dim 1 : vector<3x256xf32>, i32 -> vector<3x256xf32>
    %c5 = arith.constant 5 : index
    %c0_24 = arith.constant 0 : index
    %44 = vector.load %arg3[%c5, %c0_24] : memref<9x256xf32, #tpu.memory_space<vmem>>, vector<1x256xf32>
    %45 = vector.broadcast %44 : vector<1x256xf32> to vector<3x256xf32>
    %46 = arith.mulf %43, %45 : vector<3x256xf32>
    %c15 = arith.constant 15 : index
    %c0_25 = arith.constant 0 : index
    %47 = vector.load %arg5[%c15, %c0_25] : memref<32x256xf32, #tpu.memory_space<vmem>>, vector<3x256xf32>
    tpu.vector_store %arg5[%c15, %c0_25], %46 {strides = array<i32>} : memref<32x256xf32, #tpu.memory_space<vmem>>, vector<3x256xf32>,
    %c241_i32 = arith.constant 241 : i32
    %48 = tpu.dynamic_rotate %21 by %c241_i32 dim 1 : vector<3x256xf32>, i32 -> vector<3x256xf32>
    %c6_26 = arith.constant 6 : index
    %c0_27 = arith.constant 0 : index
    %49 = vector.load %arg3[%c6_26, %c0_27] : memref<9x256xf32, #tpu.memory_space<vmem>>, vector<1x256xf32>
    %50 = vector.broadcast %49 : vector<1x256xf32> to vector<3x256xf32>
    %51 = arith.mulf %48, %50 : vector<3x256xf32>
    %c18 = arith.constant 18 : index
    %c0_28 = arith.constant 0 : index
    %52 = vector.load %arg5[%c18, %c0_28] : memref<32x256xf32, #tpu.memory_space<vmem>>, vector<3x256xf32>
    tpu.vector_store %arg5[%c18, %c0_28], %51 {strides = array<i32>} : memref<32x256xf32, #tpu.memory_space<vmem>>, vector<3x256xf32>,
    %c240_i32 = arith.constant 240 : i32
    %53 = tpu.dynamic_rotate %21 by %c240_i32 dim 1 : vector<3x256xf32>, i32 -> vector<3x256xf32>
    %c7 = arith.constant 7 : index
    %c0_29 = arith.constant 0 : index
    %54 = vector.load %arg3[%c7, %c0_29] : memref<9x256xf32, #tpu.memory_space<vmem>>, vector<1x256xf32>
    %55 = vector.broadcast %54 : vector<1x256xf32> to vector<3x256xf32>
    %56 = arith.mulf %53, %55 : vector<3x256xf32>
    %c21 = arith.constant 21 : index
    %c0_30 = arith.constant 0 : index
    %57 = vector.load %arg5[%c21, %c0_30] : memref<32x256xf32, #tpu.memory_space<vmem>>, vector<3x256xf32>
    tpu.vector_store %arg5[%c21, %c0_30], %56 {strides = array<i32>} : memref<32x256xf32, #tpu.memory_space<vmem>>, vector<3x256xf32>,
    %c239_i32 = arith.constant 239 : i32
    %58 = tpu.dynamic_rotate %21 by %c239_i32 dim 1 : vector<3x256xf32>, i32 -> vector<3x256xf32>
    %c8 = arith.constant 8 : index
    %c0_31 = arith.constant 0 : index
    %59 = vector.load %arg3[%c8, %c0_31] : memref<9x256xf32, #tpu.memory_space<vmem>>, vector<1x256xf32>
    %60 = vector.broadcast %59 : vector<1x256xf32> to vector<3x256xf32>
    %61 = arith.mulf %58, %60 : vector<3x256xf32>
    %c24 = arith.constant 24 : index
    %c0_32 = arith.constant 0 : index
    %62 = vector.load %arg5[%c24, %c0_32] : memref<32x256xf32, #tpu.memory_space<vmem>>, vector<3x256xf32>
    tpu.vector_store %arg5[%c24, %c0_32], %61 {strides = array<i32>} : memref<32x256xf32, #tpu.memory_space<vmem>>, vector<3x256xf32>,
    %cst_33 = arith.constant 1.000000e+00 : f32
    %63 = vector.broadcast %cst_33 : f32 to vector<1x256xf32>
    %c27 = arith.constant 27 : index
    %c0_34 = arith.constant 0 : index
    %64 = vector.load %arg5[%c27, %c0_34] : memref<32x256xf32, #tpu.memory_space<vmem>>, vector<1x256xf32>
    tpu.vector_store %arg5[%c27, %c0_34], %63 {strides = array<i32>} : memref<32x256xf32, #tpu.memory_space<vmem>>, vector<1x256xf32>,
    %cst_35 = arith.constant 0.000000e+00 : f32
    %65 = vector.broadcast %cst_35 : f32 to vector<4x256xf32>
    %c28 = arith.constant 28 : index
    %c0_36 = arith.constant 0 : index
    %66 = vector.load %arg5[%c28, %c0_36] : memref<32x256xf32, #tpu.memory_space<vmem>>, vector<4x256xf32>
    tpu.vector_store %arg5[%c28, %c0_36], %65 {strides = array<i32>} : memref<32x256xf32, #tpu.memory_space<vmem>>, vector<4x256xf32>,
    %c0_37 = arith.constant 0 : index
    %c0_38 = arith.constant 0 : index
    %67 = vector.load %arg2[%c0_37, %c0_38] : memref<3x32xf32, #tpu.memory_space<vmem>>, vector<3x32xf32>
    %c0_39 = arith.constant 0 : index
    %c0_40 = arith.constant 0 : index
    %68 = vector.load %arg5[%c0_39, %c0_40] : memref<32x256xf32, #tpu.memory_space<vmem>>, vector<32x256xf32>
    %cst_41 = arith.constant dense<0.000000e+00> : vector<3x256xf32>
    %69 = tpu.matmul %67, %68, %cst_41 {dimension_numbers = #tpu.dot_dimension_numbers<[1], [0], [0], [1], [0, 0, 1, 1], [], []>} : vector<3x32xf32>, vector<32x256xf32>, vector<3x256xf32> -> vector<3x256xf32>
    %70 = arith.addf %1, %69 : vector<3x256xf32>
    %c0_42 = arith.constant 0 : index
    %c0_43 = arith.constant 0 : index
    %c0_44 = arith.constant 0 : index
    %71 = vector.load %arg4[%c0_42, %c0_43, %c0_44] : memref<1x3x256xf32, #tpu.memory_space<vmem>>, vector<1x3x256xf32>
    %72 = vector.shape_cast %71 : vector<1x3x256xf32> to vector<3x256xf32>
    %73 = vector.shape_cast %70 : vector<3x256xf32> to vector<1x3x256xf32>
    tpu.vector_store %arg4[%c0_42, %c0_43, %c0_44], %73 {strides = array<i32>} : memref<1x3x256xf32, #tpu.memory_space<vmem>>, vector<1x3x256xf32>,
    return
  }
  func.func @transform_0(%arg0: i32) -> (i32, i32, i32) {
    %c0_i32 = arith.constant 0 : i32
    %c0_i32_0 = arith.constant 0 : i32
    %c0_i32_1 = arith.constant 0 : i32
    return %arg0, %c0_i32, %c0_i32_0 : i32, i32, i32
  }
  func.func @transform_1(%arg0: i32) -> (i32, i32) {
    %c0_i32 = arith.constant 0 : i32
    %c0_i32_0 = arith.constant 0 : i32
    %c0_i32_1 = arith.constant 0 : i32
    return %c0_i32, %c0_i32_0 : i32, i32
  }
  func.func @transform_2(%arg0: i32) -> (i32, i32) {
    %c0_i32 = arith.constant 0 : i32
    %c0_i32_0 = arith.constant 0 : i32
    %c0_i32_1 = arith.constant 0 : i32
    return %c0_i32, %c0_i32_0 : i32, i32
  }
  func.func @transform_3(%arg0: i32) -> (i32, i32, i32) {
    %c0_i32 = arith.constant 0 : i32
    %c0_i32_0 = arith.constant 0 : i32
    %c0_i32_1 = arith.constant 0 : i32
    return %arg0, %c0_i32, %c0_i32_0 : i32, i32, i32
  }
}

</mosaic_0001>

<llo_original>
// kernel: tpu_custom_call.1
$region0: #{tpu_custom_call.1}
  #allocation0 [shape = 'u32[]', space=smem, size = 0x4, offset = 0x4, fixed_abs, tag = 'smem constant byte address 0x4 - core index']
  #allocation1 [shape = 'u32[72,128]{1,0:T(1,128)}', space=vmem, size = 0x9000, scoped, tag = 'internal scratch']
  #allocation2 [shape = 'f32[32,256]{1,0:T(8,128)}', space=vmem, size = 0x8000, scoped, tag = 'scratch operand']
  %s0 = inlined_call_operand.vmem [shape: f32[2,3,256], index: 0, kind: input, shape index: {}]
  %s1 = inlined_call_operand.vmem [shape: f32[3,32], index: 1, kind: input, shape index: {}]
  %s2 = inlined_call_operand.hbm [shape: f32[9,256], index: 2, kind: input, shape index: {}]
  %s3 = inlined_call_operand.vmem [shape: f32[2,3,256], index: 3, kind: output, shape index: {}]
  %s4 = sld [smem:[#allocation0]]
  $region49: #{tpu_custom_call.1} parent=0
    _
  %s6 = ssub.s32 1, %s4
  %s7 = scalar_select 0, %s6, %s4
  $region1: #{tpu_custom_call.1} parent=0
    #allocation3 [shape = 'u8[16384]{0}', space=vmem, size = 0x4000, scoped, tag = 'input window, operand 2, single buffered']
    #allocation4 [shape = 's32[2]{0}', space=sflag, size = 0x8, scoped, tag = 'scoped memory for tpu_custom_call.1']
    %8 = vsyncpa [#allocation4], 0
    loop: start=0, step=1, limit=4
    $region2: #{tpu_custom_call.1} parent=1 // loop_pre_header
      _
    $region3: #{tpu_custom_call.1} parent=1 // loop_header
      %s10 = sphi 0, %s14
      %p11 = scmp.ge.s32.totalorder %s10, 4
      %s20 = sphi 0, %s22
      %s23 = sphi 0, %s20
      %s24 = sphi 0, %s23
      %s40 = sphi 0, %s24
      %s44 = sphi 0, %s44
      %s46 = sphi 0, %s44
      %s47 = sphi 0, %s46
      %s61 = sphi 0, %s47
      %s65 = sphi 0, %s65
      %s67 = sphi 0, %s65
      %s68 = sphi 0, %s67
      %s82 = sphi 0, %s68
      %s88 = sphi 0, %s90
      %s91 = sphi 0, %s88
      %s92 = sphi 0, %s91
      %s108 = sphi 0, %s92
    $region4: #{tpu_custom_call.1} parent=1 // loop_header_branch
      %13 = sbr.rel (%p11) target = $region8
    $region5: #{tpu_custom_call.1} parent=1 // loop_body
      %s15 = ssub.s32 %s10, 1
      %s16 = ssub.s32 %s10, 2
      %s17 = sadd.s32 %s10, 1
      %s18 = ssub.s32 %s10, %s17
      %p19 = scmp.eq.s32.totalorder %s18, 0
      %s21 = sadd.s32 %s20, 1
      %s22 = scalar_select %p19, %s20, %s21
      %p25 = pneg %p19
      %p26 = scmp.eq.s32.totalorder %s10, 1
      %p27 = por %p25, %p26
      %p28 = scmp.ne.s32.totalorder %s20, %s23
      %p29 = scmp.eq.s32.totalorder %s10, 0
      %p30 = por %p28, %p29
      %p31 = scmp.ne.s32.totalorder %s20, %s23
      %p32 = scmp.eq.s32.totalorder %s15, 1
      %p33 = por %p31, %p32
      %p34 = scmp.ne.s32.totalorder %s23, %s24
      %p35 = scmp.eq.s32.totalorder %s15, 0
      %p36 = por %p34, %p35
      %p37 = scmp.ne.s32.totalorder %s23, %s24
      %p38 = scmp.eq.s32.totalorder %s16, 1
      %p39 = por %p37, %p38
      %p41 = scmp.ne.s32.totalorder %s24, %s40
      %p42 = scmp.eq.s32.totalorder %s16, 0
      %p43 = por %p41, %p42
      %s45 = sadd.s32 %s44, 1
      %p48 = scmp.eq.s32.totalorder %s10, 1
      %p49 = scmp.ne.s32.totalorder %s44, %s46
      %p50 = scmp.eq.s32.totalorder %s10, 0
      %p51 = por %p49, %p50
      %p52 = scmp.ne.s32.totalorder %s44, %s46
      %p53 = scmp.eq.s32.totalorder %s15, 1
      %p54 = por %p52, %p53
      %p55 = scmp.ne.s32.totalorder %s46, %s47
      %p56 = scmp.eq.s32.totalorder %s15, 0
      %p57 = por %p55, %p56
      %p58 = scmp.ne.s32.totalorder %s46, %s47
      %p59 = scmp.eq.s32.totalorder %s16, 1
      %p60 = por %p58, %p59
      %p62 = scmp.ne.s32.totalorder %s47, %s61
      %p63 = scmp.eq.s32.totalorder %s16, 0
      %p64 = por %p62, %p63
      %s66 = sadd.s32 %s65, 1
      %p69 = scmp.eq.s32.totalorder %s10, 1
      %p70 = scmp.ne.s32.totalorder %s65, %s67
      %p71 = scmp.eq.s32.totalorder %s10, 0
      %p72 = por %p70, %p71
      %p73 = scmp.ne.s32.totalorder %s65, %s67
      %p74 = scmp.eq.s32.totalorder %s15, 1
      %p75 = por %p73, %p74
      %p76 = scmp.ne.s32.totalorder %s67, %s68
      %p77 = scmp.eq.s32.totalorder %s15, 0
      %p78 = por %p76, %p77
      %p79 = scmp.ne.s32.totalorder %s67, %s68
      %p80 = scmp.eq.s32.totalorder %s16, 1
      %p81 = por %p79, %p80
      %p83 = scmp.ne.s32.totalorder %s68, %s82
      %p84 = scmp.eq.s32.totalorder %s16, 0
      %p85 = por %p83, %p84
      %s86 = ssub.s32 %s10, %s17
      %p87 = scmp.eq.s32.totalorder %s86, 0
      %s89 = sadd.s32 %s88, 1
      %s90 = scalar_select %p87, %s88, %s89
      %p93 = pneg %p87
      %p94 = scmp.eq.s32.totalorder %s10, 1
      %p95 = por %p93, %p94
      %p96 = scmp.ne.s32.totalorder %s88, %s91
      %p97 = scmp.eq.s32.totalorder %s10, 0
      %p98 = por %p96, %p97
      %p99 = scmp.ne.s32.totalorder %s88, %s91
      %p100 = scmp.eq.s32.totalorder %s15, 1
      %p101 = por %p99, %p100
      %p102 = scmp.ne.s32.totalorder %s91, %s92
      %p103 = scmp.eq.s32.totalorder %s15, 0
      %p104 = por %p102, %p103
      %p105 = scmp.ne.s32.totalorder %s91, %s92
      %p106 = scmp.eq.s32.totalorder %s16, 1
      %p107 = por %p105, %p106
      %p109 = scmp.ne.s32.totalorder %s92, %s108
      %p110 = scmp.eq.s32.totalorder %s16, 0
      %p111 = por %p109, %p110
      %p112 = scmp.le.s32.totalorder 1, %s10
      %p113 = scmp.lt.s32.totalorder %s10, 3
      %p114 = pnand %p112, %p113
      %p115 = pneg %p114
      // Predicated region
      $region9: #{tpu_custom_call.1} parent=5 // pred_check
        _
      $region10: #{tpu_custom_call.1} parent=5 // pred_check_branch
        %117 = sbr.rel (%p114) target = $region12
      $region11: #{tpu_custom_call.1} parent=5 // pred_region
        %s118 = ssub.s32 %s10, 1
        // Predicated region
        $region13: #{tpu_custom_call.1} parent=11 // pred_check
          %p119 = pneg %p57
        $region14: #{tpu_custom_call.1} parent=11 // pred_check_branch
          %121 = sbr.rel (%p119) target = $region16
        $region15: #{tpu_custom_call.1} parent=11 // pred_region
          _
        $region16: #{tpu_custom_call.1} parent=11 // pred_fallthru
          _
        // Predicated region
        $region17: #{tpu_custom_call.1} parent=11 // pred_check
          %p122 = pneg %p78
        $region18: #{tpu_custom_call.1} parent=11 // pred_check_branch
          %124 = sbr.rel (%p122) target = $region20
        $region19: #{tpu_custom_call.1} parent=11 // pred_region
          %126 = vsyncadd [#allocation4], 0
          %s127 = sshll.u32 %s2, 4
          %s128 = int_to_ptr.hbm [resolvable:$true] %s127
          %s129 = sshll.u32 [#allocation3], 4
          %s130 = int_to_ptr.vmem [resolvable:$true] %s129
          %135 = dma.hbm_to_vmem [thread:$0]  %s128, 512, %s130, [#allocation4], 256, 256, 16
        $region20: #{tpu_custom_call.1} parent=11 // pred_fallthru
          _
      $region12: #{tpu_custom_call.1} parent=5 // pred_fallthru
        _
      %p136 = scmp.lt.s32.totalorder %s10, 2
      // Predicated region
      $region21: #{tpu_custom_call.1} parent=5 // pred_check
        %p137 = pneg %p136
      $region22: #{tpu_custom_call.1} parent=5 // pred_check_branch
        %139 = sbr.rel (%p137) target = $region24
      $region23: #{tpu_custom_call.1} parent=5 // pred_region
        // Predicated region
        $region25: #{tpu_custom_call.1} parent=23 // pred_check
          %p140 = pneg %p30
        $region26: #{tpu_custom_call.1} parent=23 // pred_check_branch
          %142 = sbr.rel (%p140) target = $region28
        $region27: #{tpu_custom_call.1} parent=23 // pred_region
          %p143 = scmp.lt.s32.totalorder %s10, 1
          %s144 = scalar_select %p143, %s10, 1
          %s145 = smul.addr %s144, 2
          %s146 = smul.addr %s145, 4
          %s147 = scalar_lea.vmem %s0, %s146
        $region28: #{tpu_custom_call.1} parent=23 // pred_fallthru
          _
      $region24: #{tpu_custom_call.1} parent=5 // pred_fallthru
        _
      %p148 = scmp.le.s32.totalorder 1, %s10
      %p149 = scmp.lt.s32.totalorder %s10, 3
      %p150 = pnand %p148, %p149
      %p151 = pneg %p150
      // Predicated region
      $region29: #{tpu_custom_call.1} parent=5 // pred_check
        _
      $region30: #{tpu_custom_call.1} parent=5 // pred_check_branch
        %153 = sbr.rel (%p150) target = $region32
      $region31: #{tpu_custom_call.1} parent=5 // pred_region
        %s154 = ssub.s32 %s10, 1
        // Predicated region
        $region33: #{tpu_custom_call.1} parent=31 // pred_check
          %p155 = pneg %p78
        $region34: #{tpu_custom_call.1} parent=31 // pred_check_branch
          %157 = sbr.rel (%p155) target = $region36
        $region35: #{tpu_custom_call.1} parent=31 // pred_region
          %159 = dma.done [#allocation4], 512
        $region36: #{tpu_custom_call.1} parent=31 // pred_fallthru
          _
        %p160 = scmp.lt.s32.totalorder %s15, 1
        %s161 = scalar_select %p160, %s15, 1
        %s162 = smul.addr %s161, 2
        %s163 = smul.addr %s162, 4
        %s164 = scalar_lea.vmem %s0, %s163
        %p165 = pneg %p36
        %p166 = pneg %p33
        %p167 = pneg %p57
        %p168 = pneg %p54
        %p169 = pneg %p78
        %p170 = pneg %p75
        %p171 = pneg %p104
        %p172 = pneg %p101
        %p173 = scmp.lt.s32.totalorder %s15, 1
        %s174 = scalar_select %p173, %s15, 1
        %s175 = smul.addr %s174, 2
        %s176 = smul.addr %s175, 4
        %s177 = scalar_lea.vmem %s3, %s176
        %p178 = scmp.lt.s32.totalorder %s15, 1
        %s179 = scalar_select %p178, %s15, 1
        %s180 = smul.addr %s179, 2
        %s181 = smul.addr %s180, 4
        %s182 = scalar_lea.vmem %s0, %s181
        %p183 = scmp.lt.s32.totalorder %s15, 1
        %s184 = scalar_select %p183, %s15, 1
        %s185 = smul.addr %s184, 2
        %s186 = smul.addr %s185, 4
        %s187 = scalar_lea.vmem %s3, %s186
        %v188 = vld [vmem:[%s182] sm:$0x77]
        %v189 = vmul.f32 %v188, 0.57735026
        %191 = vst [vmem:[#allocation1] ss:$2 sm:$0xff] %v189
        %v192 = vld.sshfl [vmem:[#allocation1] sm:$0xff pattern:$0x75316420]
        %v193 = vld.sshfl [vmem:[#allocation1 + $0x8] sm:$0xff pattern:$0x75316420]
        %196 = vxpose.xlu0.b32.start [1/16] %v192, 128
        %197 = vxpose.xlu0.b32.cont [2/16] 0.0, 128
        %198 = vxpose.xlu0.b32.cont [3/16] 0.0, 128
        %199 = vxpose.xlu0.b32.cont [4/16] 0.0, 128
        %200 = vxpose.xlu0.b32.cont [5/16] 0.0, 128
        %201 = vxpose.xlu0.b32.cont [6/16] 0.0, 128
        %202 = vxpose.xlu0.b32.cont [7/16] 0.0, 128
        %203 = vxpose.xlu0.b32.cont [8/16] 0.0, 128
        %204 = vxpose.xlu0.b32.cont [9/16] 0.0, 128
        %205 = vxpose.xlu0.b32.cont [10/16] 0.0, 128
        %206 = vxpose.xlu0.b32.cont [11/16] 0.0, 128
        %207 = vxpose.xlu0.b32.cont [12/16] 0.0, 128
        %208 = vxpose.xlu0.b32.cont [13/16] 0.0, 128
        %209 = vxpose.xlu0.b32.cont [14/16] 0.0, 128
        %210 = vxpose.xlu0.b32.cont [15/16] 0.0, 128
        %211 = vxpose.xlu0.b32.end [16/16] 0.0, 128
        %v212 = vpop.trf.xlu0
        %v213 = vpop.trf.xlu0
        %v214 = vpop.trf.xlu0
        %v215 = vpop.trf.xlu0
        %v216 = vpop.trf.xlu0
        %v217 = vpop.trf.xlu0
        %v218 = vpop.trf.xlu0
        %v219 = vpop.trf.xlu0
        %v220 = vpop.trf.xlu0
        %v221 = vpop.trf.xlu0
        %v222 = vpop.trf.xlu0
        %v223 = vpop.trf.xlu0
        %v224 = vpop.trf.xlu0
        %v225 = vpop.trf.xlu0
        %v226 = vpop.trf.xlu0
        %v227 = vpop.trf.xlu0
        %228 = vxpose.xlu0.b32.start [1/16] %v193, 128
        %229 = vxpose.xlu0.b32.cont [2/16] 0.0, 128
        %230 = vxpose.xlu0.b32.cont [3/16] 0.0, 128
        %231 = vxpose.xlu0.b32.cont [4/16] 0.0, 128
        %232 = vxpose.xlu0.b32.cont [5/16] 0.0, 128
        %233 = vxpose.xlu0.b32.cont [6/16] 0.0, 128
        %234 = vxpose.xlu0.b32.cont [7/16] 0.0, 128
        %235 = vxpose.xlu0.b32.cont [8/16] 0.0, 128
        %236 = vxpose.xlu0.b32.cont [9/16] 0.0, 128
        %237 = vxpose.xlu0.b32.cont [10/16] 0.0, 128
        %238 = vxpose.xlu0.b32.cont [11/16] 0.0, 128
        %239 = vxpose.xlu0.b32.cont [12/16] 0.0, 128
        %240 = vxpose.xlu0.b32.cont [13/16] 0.0, 128
        %241 = vxpose.xlu0.b32.cont [14/16] 0.0, 128
        %242 = vxpose.xlu0.b32.cont [15/16] 0.0, 128
        %243 = vxpose.xlu0.b32.end [16/16] 0.0, 128
        %v244 = vpop.trf.xlu0
        %v245 = vpop.trf.xlu0
        %v246 = vpop.trf.xlu0
        %v247 = vpop.trf.xlu0
        %v248 = vpop.trf.xlu0
        %v249 = vpop.trf.xlu0
        %v250 = vpop.trf.xlu0
        %v251 = vpop.trf.xlu0
        %v252 = vpop.trf.xlu0
        %v253 = vpop.trf.xlu0
        %v254 = vpop.trf.xlu0
        %v255 = vpop.trf.xlu0
        %v256 = vpop.trf.xlu0
        %v257 = vpop.trf.xlu0
        %v258 = vpop.trf.xlu0
        %v259 = vpop.trf.xlu0
        %261 = vst [vmem:[#allocation1] ss:$2 sm:$0xff] %v188
        %v262 = vld.sshfl [vmem:[#allocation1] sm:$0xff pattern:$0x75316420]
        %v263 = vld.sshfl [vmem:[#allocation1 + $0x8] sm:$0xff pattern:$0x75316420]
        %vm264 = vcmask 23552
        %v266 = vsel %vm264, %v212, 0
        %v269 = vsel %vm264, %v213, 0
        %v272 = vsel %vm264, %v214, 0
        %v275 = vsel %vm264, %v215, 0
        %v278 = vsel %vm264, %v216, 0
        %v281 = vsel %vm264, %v217, 0
        %v284 = vsel %vm264, %v218, 0
        %v287 = vsel %vm264, %v219, 0
        %v290 = vsel %vm264, %v220, 0
        %v293 = vsel %vm264, %v221, 0
        %v296 = vsel %vm264, %v222, 0
        %v299 = vsel %vm264, %v223, 0
        %v302 = vsel %vm264, %v224, 0
        %v305 = vsel %vm264, %v225, 0
        %v308 = vsel %vm264, %v226, 0
        %v311 = vsel %vm264, %v227, 0
        %v314 = vsel %vm264, %v244, 0
        %v317 = vsel %vm264, %v245, 0
        %v320 = vsel %vm264, %v246, 0
        %v323 = vsel %vm264, %v247, 0
        %v326 = vsel %vm264, %v248, 0
        %v329 = vsel %vm264, %v249, 0
        %v332 = vsel %vm264, %v250, 0
        %v335 = vsel %vm264, %v251, 0
        %v338 = vsel %vm264, %v252, 0
        %v341 = vsel %vm264, %v253, 0
        %v344 = vsel %vm264, %v254, 0
        %v347 = vsel %vm264, %v255, 0
        %v350 = vsel %vm264, %v256, 0
        %v353 = vsel %vm264, %v257, 0
        %v356 = vsel %vm264, %v258, 0
        %v359 = vsel %vm264, %v259, 0
        %vm361 = vcmask 1042432
        %v362 = vsel %vm361, %v262, 0
        %v364 = vsel %vm361, %v263, 0
        %366 = vmatpush.msra.mxu0 0.0
        %367 = vmatpush.msra.mxu0 0.0
        %368 = vmatpush.msra.mxu0 0.0
        %369 = vmatpush.msra.mxu0 0.0
        %370 = vmatpush.msra.mxu0 0.0
        %371 = vmatpush.msra.mxu0 0.0
        %372 = vmatpush.msra.mxu0 0.0
        %373 = vmatpush.msra.mxu0 0.0
        %374 = vmatpush.msra.mxu0 0.0
        %375 = vmatpush.msra.mxu0 0.0
        %376 = vmatpush.msra.mxu0 0.0
        %377 = vmatpush.msra.mxu0 0.0
        %378 = vmatpush.msra.mxu0 0.0
        %379 = vmatpush.msra.mxu0 0.0
        %380 = vmatpush.msra.mxu0 0.0
        %381 = vmatpush.msra.mxu0 %v362
        %382 = vmatmul.f32.gmra.mxu0 %v266
        %v383 = vpop.f32.mrf.mxu0
        %v384 = vadd.f32 0.0, %v383
        %385 = vmatmul.f32.gmra.mxu0 %v269
        %v386 = vpop.f32.mrf.mxu0
        %v387 = vadd.f32 0.0, %v386
        %388 = vmatmul.f32.gmra.mxu0 %v272
        %v389 = vpop.f32.mrf.mxu0
        %v390 = vadd.f32 0.0, %v389
        %391 = vmatmul.f32.gmra.mxu0 %v275
        %v392 = vpop.f32.mrf.mxu0
        %v393 = vadd.f32 0.0, %v392
        %394 = vmatmul.f32.gmra.mxu0 %v278
        %v395 = vpop.f32.mrf.mxu0
        %v396 = vadd.f32 0.0, %v395
        %397 = vmatmul.f32.gmra.mxu0 %v281
        %v398 = vpop.f32.mrf.mxu0
        %v399 = vadd.f32 0.0, %v398
        %400 = vmatmul.f32.gmra.mxu0 %v284
        %v401 = vpop.f32.mrf.mxu0
        %v402 = vadd.f32 0.0, %v401
        %403 = vmatmul.f32.gmra.mxu0 %v287
        %v404 = vpop.f32.mrf.mxu0
        %v405 = vadd.f32 0.0, %v404
        %406 = vmatmul.f32.gmra.mxu0 %v290
        %v407 = vpop.f32.mrf.mxu0
        %v408 = vadd.f32 0.0, %v407
        %409 = vmatmul.f32.gmra.mxu0 %v293
        %v410 = vpop.f32.mrf.mxu0
        %v411 = vadd.f32 0.0, %v410
        %412 = vmatmul.f32.gmra.mxu0 %v296
        %v413 = vpop.f32.mrf.mxu0
        %v414 = vadd.f32 0.0, %v413
        %415 = vmatmul.f32.gmra.mxu0 %v299
        %v416 = vpop.f32.mrf.mxu0
        %v417 = vadd.f32 0.0, %v416
        %418 = vmatmul.f32.gmra.mxu0 %v302
        %v419 = vpop.f32.mrf.mxu0
        %v420 = vadd.f32 0.0, %v419
        %421 = vmatmul.f32.gmra.mxu0 %v305
        %v422 = vpop.f32.mrf.mxu0
        %v423 = vadd.f32 0.0, %v422
        %424 = vmatmul.f32.gmra.mxu0 %v308
        %v425 = vpop.f32.mrf.mxu0
        %v426 = vadd.f32 0.0, %v425
        %427 = vmatmul.f32.gmra.mxu0 %v311
        %v428 = vpop.f32.mrf.mxu0
        %v429 = vadd.f32 0.0, %v428
        %430 = vmatmul.f32.gmra.mxu0 %v314
        %v431 = vpop.f32.mrf.mxu0
        %v432 = vadd.f32 0.0, %v431
        %433 = vmatmul.f32.gmra.mxu0 %v317
        %v434 = vpop.f32.mrf.mxu0
        %v435 = vadd.f32 0.0, %v434
        %436 = vmatmul.f32.gmra.mxu0 %v320
        %v437 = vpop.f32.mrf.mxu0
        %v438 = vadd.f32 0.0, %v437
        %439 = vmatmul.f32.gmra.mxu0 %v323
        %v440 = vpop.f32.mrf.mxu0
        %v441 = vadd.f32 0.0, %v440
        %442 = vmatmul.f32.gmra.mxu0 %v326
        %v443 = vpop.f32.mrf.mxu0
        %v444 = vadd.f32 0.0, %v443
        %445 = vmatmul.f32.gmra.mxu0 %v329
        %v446 = vpop.f32.mrf.mxu0
        %v447 = vadd.f32 0.0, %v446
        %448 = vmatmul.f32.gmra.mxu0 %v332
        %v449 = vpop.f32.mrf.mxu0
        %v450 = vadd.f32 0.0, %v449
        %451 = vmatmul.f32.gmra.mxu0 %v335
        %v452 = vpop.f32.mrf.mxu0
        %v453 = vadd.f32 0.0, %v452
        %454 = vmatmul.f32.gmra.mxu0 %v338
        %v455 = vpop.f32.mrf.mxu0
        %v456 = vadd.f32 0.0, %v455
        %457 = vmatmul.f32.gmra.mxu0 %v341
        %v458 = vpop.f32.mrf.mxu0
        %v459 = vadd.f32 0.0, %v458
        %460 = vmatmul.f32.gmra.mxu0 %v344
        %v461 = vpop.f32.mrf.mxu0
        %v462 = vadd.f32 0.0, %v461
        %463 = vmatmul.f32.gmra.mxu0 %v347
        %v464 = vpop.f32.mrf.mxu0
        %v465 = vadd.f32 0.0, %v464
        %466 = vmatmul.f32.gmra.mxu0 %v350
        %v467 = vpop.f32.mrf.mxu0
        %v468 = vadd.f32 0.0, %v467
        %469 = vmatmul.f32.gmra.mxu0 %v353
        %v470 = vpop.f32.mrf.mxu0
        %v471 = vadd.f32 0.0, %v470
        %472 = vmatmul.f32.gmra.mxu0 %v356
        %v473 = vpop.f32.mrf.mxu0
        %v474 = vadd.f32 0.0, %v473
        %475 = vmatmul.f32.gmra.mxu0 %v359
        %v476 = vpop.f32.mrf.mxu0
        %v477 = vadd.f32 0.0, %v476
        %478 = vdwg.mxu0
        %479 = vmatpush.msra.mxu0 0.0
        %480 = vmatpush.msra.mxu0 0.0
        %481 = vmatpush.msra.mxu0 0.0
        %482 = vmatpush.msra.mxu0 0.0
        %483 = vmatpush.msra.mxu0 0.0
        %484 = vmatpush.msra.mxu0 0.0
        %485 = vmatpush.msra.mxu0 0.0
        %486 = vmatpush.msra.mxu0 0.0
        %487 = vmatpush.msra.mxu0 0.0
        %488 = vmatpush.msra.mxu0 0.0
        %489 = vmatpush.msra.mxu0 0.0
        %490 = vmatpush.msra.mxu0 0.0
        %491 = vmatpush.msra.mxu0 0.0
        %492 = vmatpush.msra.mxu0 0.0
        %493 = vmatpush.msra.mxu0 0.0
        %494 = vmatpush.msra.mxu0 %v364
        %495 = vmatmul.f32.gmra.mxu0 %v266
        %v496 = vpop.f32.mrf.mxu0
        %v497 = vadd.f32 0.0, %v496
        %498 = vmatmul.f32.gmra.mxu0 %v269
        %v499 = vpop.f32.mrf.mxu0
        %v500 = vadd.f32 0.0, %v499
        %501 = vmatmul.f32.gmra.mxu0 %v272
        %v502 = vpop.f32.mrf.mxu0
        %v503 = vadd.f32 0.0, %v502
        %504 = vmatmul.f32.gmra.mxu0 %v275
        %v505 = vpop.f32.mrf.mxu0
        %v506 = vadd.f32 0.0, %v505
        %507 = vmatmul.f32.gmra.mxu0 %v278
        %v508 = vpop.f32.mrf.mxu0
        %v509 = vadd.f32 0.0, %v508
        %510 = vmatmul.f32.gmra.mxu0 %v281
        %v511 = vpop.f32.mrf.mxu0
        %v512 = vadd.f32 0.0, %v511
        %513 = vmatmul.f32.gmra.mxu0 %v284
        %v514 = vpop.f32.mrf.mxu0
        %v515 = vadd.f32 0.0, %v514
        %516 = vmatmul.f32.gmra.mxu0 %v287
        %v517 = vpop.f32.mrf.mxu0
        %v518 = vadd.f32 0.0, %v517
        %519 = vmatmul.f32.gmra.mxu0 %v290
        %v520 = vpop.f32.mrf.mxu0
        %v521 = vadd.f32 0.0, %v520
        %522 = vmatmul.f32.gmra.mxu0 %v293
        %v523 = vpop.f32.mrf.mxu0
        %v524 = vadd.f32 0.0, %v523
        %525 = vmatmul.f32.gmra.mxu0 %v296
        %v526 = vpop.f32.mrf.mxu0
        %v527 = vadd.f32 0.0, %v526
        %528 = vmatmul.f32.gmra.mxu0 %v299
        %v529 = vpop.f32.mrf.mxu0
        %v530 = vadd.f32 0.0, %v529
        %531 = vmatmul.f32.gmra.mxu0 %v302
        %v532 = vpop.f32.mrf.mxu0
        %v533 = vadd.f32 0.0, %v532
        %534 = vmatmul.f32.gmra.mxu0 %v305
        %v535 = vpop.f32.mrf.mxu0
        %v536 = vadd.f32 0.0, %v535
        %537 = vmatmul.f32.gmra.mxu0 %v308
        %v538 = vpop.f32.mrf.mxu0
        %v539 = vadd.f32 0.0, %v538
        %540 = vmatmul.f32.gmra.mxu0 %v311
        %v541 = vpop.f32.mrf.mxu0
        %v542 = vadd.f32 0.0, %v541
        %543 = vmatmul.f32.gmra.mxu0 %v314
        %v544 = vpop.f32.mrf.mxu0
        %v545 = vadd.f32 0.0, %v544
        %546 = vmatmul.f32.gmra.mxu0 %v317
        %v547 = vpop.f32.mrf.mxu0
        %v548 = vadd.f32 0.0, %v547
        %549 = vmatmul.f32.gmra.mxu0 %v320
        %v550 = vpop.f32.mrf.mxu0
        %v551 = vadd.f32 0.0, %v550
        %552 = vmatmul.f32.gmra.mxu0 %v323
        %v553 = vpop.f32.mrf.mxu0
        %v554 = vadd.f32 0.0, %v553
        %555 = vmatmul.f32.gmra.mxu0 %v326
        %v556 = vpop.f32.mrf.mxu0
        %v557 = vadd.f32 0.0, %v556
        %558 = vmatmul.f32.gmra.mxu0 %v329
        %v559 = vpop.f32.mrf.mxu0
        %v560 = vadd.f32 0.0, %v559
        %561 = vmatmul.f32.gmra.mxu0 %v332
        %v562 = vpop.f32.mrf.mxu0
        %v563 = vadd.f32 0.0, %v562
        %564 = vmatmul.f32.gmra.mxu0 %v335
        %v565 = vpop.f32.mrf.mxu0
        %v566 = vadd.f32 0.0, %v565
        %567 = vmatmul.f32.gmra.mxu0 %v338
        %v568 = vpop.f32.mrf.mxu0
        %v569 = vadd.f32 0.0, %v568
        %570 = vmatmul.f32.gmra.mxu0 %v341
        %v571 = vpop.f32.mrf.mxu0
        %v572 = vadd.f32 0.0, %v571
        %573 = vmatmul.f32.gmra.mxu0 %v344
        %v574 = vpop.f32.mrf.mxu0
        %v575 = vadd.f32 0.0, %v574
        %576 = vmatmul.f32.gmra.mxu0 %v347
        %v577 = vpop.f32.mrf.mxu0
        %v578 = vadd.f32 0.0, %v577
        %579 = vmatmul.f32.gmra.mxu0 %v350
        %v580 = vpop.f32.mrf.mxu0
        %v581 = vadd.f32 0.0, %v580
        %582 = vmatmul.f32.gmra.mxu0 %v353
        %v583 = vpop.f32.mrf.mxu0
        %v584 = vadd.f32 0.0, %v583
        %585 = vmatmul.f32.gmra.mxu0 %v356
        %v586 = vpop.f32.mrf.mxu0
        %v587 = vadd.f32 0.0, %v586
        %588 = vmatmul.f32.gmra.mxu0 %v359
        %v589 = vpop.f32.mrf.mxu0
        %v590 = vadd.f32 0.0, %v589
        %591 = vdwg.mxu0
        %v592 = vmax.f32 %v384, %v390
        %v593 = vmax.f32 %v497, %v503
        %v594 = vmax.f32 %v387, %v393
        %v595 = vmax.f32 %v500, %v506
        %v596 = vmax.f32 %v592, %v396
        %v597 = vmax.f32 %v593, %v509
        %v598 = vmax.f32 %v594, %v399
        %v599 = vmax.f32 %v595, %v512
        %v600 = vmax.f32 %v596, %v402
        %v601 = vmax.f32 %v597, %v515
        %v602 = vmax.f32 %v598, %v405
        %v603 = vmax.f32 %v599, %v518
        %v604 = vmax.f32 %v600, %v408
        %v605 = vmax.f32 %v601, %v521
        %v606 = vmax.f32 %v602, %v411
        %v607 = vmax.f32 %v603, %v524
        %v608 = vmax.f32 %v604, %v414
        %v609 = vmax.f32 %v605, %v527
        %v610 = vmax.f32 %v606, %v417
        %v611 = vmax.f32 %v607, %v530
        %v612 = vmax.f32 %v608, %v420
        %v613 = vmax.f32 %v609, %v533
        %v614 = vmax.f32 %v610, %v423
        %v615 = vmax.f32 %v611, %v536
        %v616 = vmax.f32 %v612, %v426
        %v617 = vmax.f32 %v613, %v539
        %v618 = vmax.f32 %v614, %v429
        %v619 = vmax.f32 %v615, %v542
        %v620 = vmax.f32 %v616, %v432
        %v621 = vmax.f32 %v617, %v545
        %v622 = vmax.f32 %v618, %v435
        %v623 = vmax.f32 %v619, %v548
        %v624 = vmax.f32 %v620, %v438
        %v625 = vmax.f32 %v621, %v551
        %v626 = vmax.f32 %v622, %v441
        %v627 = vmax.f32 %v623, %v554
        %v628 = vmax.f32 %v624, %v444
        %v629 = vmax.f32 %v625, %v557
        %v630 = vmax.f32 %v626, %v447
        %v631 = vmax.f32 %v627, %v560
        %v632 = vmax.f32 %v628, %v450
        %v633 = vmax.f32 %v629, %v563
        %v634 = vmax.f32 %v630, %v453
        %v635 = vmax.f32 %v631, %v566
        %v636 = vmax.f32 %v632, %v456
        %v637 = vmax.f32 %v633, %v569
        %v638 = vmax.f32 %v634, %v459
        %v639 = vmax.f32 %v635, %v572
        %v640 = vmax.f32 %v636, %v462
        %v641 = vmax.f32 %v637, %v575
        %v642 = vmax.f32 %v638, %v465
        %v643 = vmax.f32 %v639, %v578
        %v644 = vmax.f32 %v640, %v468
        %v645 = vmax.f32 %v641, %v581
        %v646 = vmax.f32 %v642, %v471
        %v647 = vmax.f32 %v643, %v584
        %v648 = vmax.f32 %v644, %v474
        %v649 = vmax.f32 %v645, %v587
        %v650 = vmax.f32 %v646, %v477
        %v651 = vmax.f32 %v647, %v590
        %v652 = vmax.f32 %v648, %v649
        %v653 = vmax.f32 %v650, %v651
        %v654 = vmax.f32 %v652, %v653
        %655 = vmax.xlane.f32.xlu0 %v654
        %v656 = vpop.xlane.xlu0 %655
        %v657 = vrot.slane %v656, 4
        %v658 = vmax.f32 %v656, %v657
        %v659 = vrot.slane %v658, 2
        %v660 = vmax.f32 %v658, %v659
        %v661 = vrot.slane %v660, 1
        %v662 = vmax.f32 %v660, %v661
        %s663 = vtos %v662
        %v664 = vstv %s663
        %v665 = vsub.f32 %v384, %v664
        %v666 = vsub.f32 %v497, %v664
        %v667 = vsub.f32 %v387, %v664
        %v668 = vsub.f32 %v500, %v664
        %v669 = vsub.f32 %v390, %v664
        %v670 = vsub.f32 %v503, %v664
        %v671 = vsub.f32 %v393, %v664
        %v672 = vsub.f32 %v506, %v664
        %v673 = vsub.f32 %v396, %v664
        %v674 = vsub.f32 %v509, %v664
        %v675 = vsub.f32 %v399, %v664
        %v676 = vsub.f32 %v512, %v664
        %v677 = vsub.f32 %v402, %v664
        %v678 = vsub.f32 %v515, %v664
        %v679 = vsub.f32 %v405, %v664
        %v680 = vsub.f32 %v518, %v664
        %v681 = vsub.f32 %v408, %v664
        %v682 = vsub.f32 %v521, %v664
        %v683 = vsub.f32 %v411, %v664
        %v684 = vsub.f32 %v524, %v664
        %v685 = vsub.f32 %v414, %v664
        %v686 = vsub.f32 %v527, %v664
        %v687 = vsub.f32 %v417, %v664
        %v688 = vsub.f32 %v530, %v664
        %v689 = vsub.f32 %v420, %v664
        %v690 = vsub.f32 %v533, %v664
        %v691 = vsub.f32 %v423, %v664
        %v692 = vsub.f32 %v536, %v664
        %v693 = vsub.f32 %v426, %v664
        %v694 = vsub.f32 %v539, %v664
        %v695 = vsub.f32 %v429, %v664
        %v696 = vsub.f32 %v542, %v664
        %v697 = vsub.f32 %v432, %v664
        %v698 = vsub.f32 %v545, %v664
        %v699 = vsub.f32 %v435, %v664
        %v700 = vsub.f32 %v548, %v664
        %v701 = vsub.f32 %v438, %v664
        %v702 = vsub.f32 %v551, %v664
        %v703 = vsub.f32 %v441, %v664
        %v704 = vsub.f32 %v554, %v664
        %v705 = vsub.f32 %v444, %v664
        %v706 = vsub.f32 %v557, %v664
        %v707 = vsub.f32 %v447, %v664
        %v708 = vsub.f32 %v560, %v664
        %v709 = vsub.f32 %v450, %v664
        %v710 = vsub.f32 %v563, %v664
        %v711 = vsub.f32 %v453, %v664
        %v712 = vsub.f32 %v566, %v664
        %v713 = vsub.f32 %v456, %v664
        %v714 = vsub.f32 %v569, %v664
        %v715 = vsub.f32 %v459, %v664
        %v716 = vsub.f32 %v572, %v664
        %v717 = vsub.f32 %v462, %v664
        %v718 = vsub.f32 %v575, %v664
        %v719 = vsub.f32 %v465, %v664
        %v720 = vsub.f32 %v578, %v664
        %v721 = vsub.f32 %v468, %v664
        %v722 = vsub.f32 %v581, %v664
        %v723 = vsub.f32 %v471, %v664
        %v724 = vsub.f32 %v584, %v664
        %v725 = vsub.f32 %v474, %v664
        %v726 = vsub.f32 %v587, %v664
        %v727 = vsub.f32 %v477, %v664
        %v728 = vsub.f32 %v590, %v664
        %v729 = vmul.f32 %v665, 1.442695
        %v730 = vpow.pop %v729
        %v731 = vmul.f32 %v666, 1.442695
        %v732 = vpow.pop %v731
        %v733 = vmul.f32 %v667, 1.442695
        %v734 = vpow.pop %v733
        %v735 = vmul.f32 %v668, 1.442695
        %v736 = vpow.pop %v735
        %v737 = vmul.f32 %v669, 1.442695
        %v738 = vpow.pop %v737
        %v739 = vmul.f32 %v670, 1.442695
        %v740 = vpow.pop %v739
        %v741 = vmul.f32 %v671, 1.442695
        %v742 = vpow.pop %v741
        %v743 = vmul.f32 %v672, 1.442695
        %v744 = vpow.pop %v743
        %v745 = vmul.f32 %v673, 1.442695
        %v746 = vpow.pop %v745
        %v747 = vmul.f32 %v674, 1.442695
        %v748 = vpow.pop %v747
        %v749 = vmul.f32 %v675, 1.442695
        %v750 = vpow.pop %v749
        %v751 = vmul.f32 %v676, 1.442695
        %v752 = vpow.pop %v751
        %v753 = vmul.f32 %v677, 1.442695
        %v754 = vpow.pop %v753
        %v755 = vmul.f32 %v678, 1.442695
        %v756 = vpow.pop %v755
        %v757 = vmul.f32 %v679, 1.442695
        %v758 = vpow.pop %v757
        %v759 = vmul.f32 %v680, 1.442695
        %v760 = vpow.pop %v759
        %v761 = vmul.f32 %v681, 1.442695
        %v762 = vpow.pop %v761
        %v763 = vmul.f32 %v682, 1.442695
        %v764 = vpow.pop %v763
        %v765 = vmul.f32 %v683, 1.442695
        %v766 = vpow.pop %v765
        %v767 = vmul.f32 %v684, 1.442695
        %v768 = vpow.pop %v767
        %v769 = vmul.f32 %v685, 1.442695
        %v770 = vpow.pop %v769
        %v771 = vmul.f32 %v686, 1.442695
        %v772 = vpow.pop %v771
        %v773 = vmul.f32 %v687, 1.442695
        %v774 = vpow.pop %v773
        %v775 = vmul.f32 %v688, 1.442695
        %v776 = vpow.pop %v775
        %v777 = vmul.f32 %v689, 1.442695
        %v778 = vpow.pop %v777
        %v779 = vmul.f32 %v690, 1.442695
        %v780 = vpow.pop %v779
        %v781 = vmul.f32 %v691, 1.442695
        %v782 = vpow.pop %v781
        %v783 = vmul.f32 %v692, 1.442695
        %v784 = vpow.pop %v783
        %v785 = vmul.f32 %v693, 1.442695
        %v786 = vpow.pop %v785
        %v787 = vmul.f32 %v694, 1.442695
        %v788 = vpow.pop %v787
        %v789 = vmul.f32 %v695, 1.442695
        %v790 = vpow.pop %v789
        %v791 = vmul.f32 %v696, 1.442695
        %v792 = vpow.pop %v791
        %v793 = vmul.f32 %v697, 1.442695
        %v794 = vpow.pop %v793
        %v795 = vmul.f32 %v698, 1.442695
        %v796 = vpow.pop %v795
        %v797 = vmul.f32 %v699, 1.442695
        %v798 = vpow.pop %v797
        %v799 = vmul.f32 %v700, 1.442695
        %v800 = vpow.pop %v799
        %v801 = vmul.f32 %v701, 1.442695
        %v802 = vpow.pop %v801
        %v803 = vmul.f32 %v702, 1.442695
        %v804 = vpow.pop %v803
        %v805 = vmul.f32 %v703, 1.442695
        %v806 = vpow.pop %v805
        %v807 = vmul.f32 %v704, 1.442695
        %v808 = vpow.pop %v807
        %v809 = vmul.f32 %v705, 1.442695
        %v810 = vpow.pop %v809
        %v811 = vmul.f32 %v706, 1.442695
        %v812 = vpow.pop %v811
        %v813 = vmul.f32 %v707, 1.442695
        %v814 = vpow.pop %v813
        %v815 = vmul.f32 %v708, 1.442695
        %v816 = vpow.pop %v815
        %v817 = vmul.f32 %v709, 1.442695
        %v818 = vpow.pop %v817
        %v819 = vmul.f32 %v710, 1.442695
        %v820 = vpow.pop %v819
        %v821 = vmul.f32 %v711, 1.442695
        %v822 = vpow.pop %v821
        %v823 = vmul.f32 %v712, 1.442695
        %v824 = vpow.pop %v823
        %v825 = vmul.f32 %v713, 1.442695
        %v826 = vpow.pop %v825
        %v827 = vmul.f32 %v714, 1.442695
        %v828 = vpow.pop %v827
        %v829 = vmul.f32 %v715, 1.442695
        %v830 = vpow.pop %v829
        %v831 = vmul.f32 %v716, 1.442695
        %v832 = vpow.pop %v831
        %v833 = vmul.f32 %v717, 1.442695
        %v834 = vpow.pop %v833
        %v835 = vmul.f32 %v718, 1.442695
        %v836 = vpow.pop %v835
        %v837 = vmul.f32 %v719, 1.442695
        %v838 = vpow.pop %v837
        %v839 = vmul.f32 %v720, 1.442695
        %v840 = vpow.pop %v839
        %v841 = vmul.f32 %v721, 1.442695
        %v842 = vpow.pop %v841
        %v843 = vmul.f32 %v722, 1.442695
        %v844 = vpow.pop %v843
        %v845 = vmul.f32 %v723, 1.442695
        %v846 = vpow.pop %v845
        %v847 = vmul.f32 %v724, 1.442695
        %v848 = vpow.pop %v847
        %v849 = vmul.f32 %v725, 1.442695
        %v850 = vpow.pop %v849
        %v851 = vmul.f32 %v726, 1.442695
        %v852 = vpow.pop %v851
        %v853 = vmul.f32 %v727, 1.442695
        %v854 = vpow.pop %v853
        %v855 = vmul.f32 %v728, 1.442695
        %v856 = vpow.pop %v855
        %857 = vst [vmem:[#allocation1] ss:$2 sm:$0xff] %v188
        %v858 = vld.sshfl [vmem:[#allocation1] sm:$0xff pattern:$0x75316420]
        %v859 = vld.sshfl [vmem:[#allocation1 + $0x8] sm:$0xff pattern:$0x75316420]
        %862 = vst [vmem:[#allocation2] sm:$0x7] %v858
        %863 = vst [vmem:[#allocation2 + $0x8] sm:$0x7] %v859
        %v864 = vlaneseq
        %vm865 = vcmp.ge.s32.totalorder %v864, 0
        %vm866 = vcmp.lt.s32.totalorder %v864, 256
        %vm867 = vmand %vm865, %vm866
        %s868 = scalar_lea.vmem [#allocation2], 3
        %869 = vst.msk [vmem:[%s868] ss:$8 sm:$0x3] %vm867, 1.0
        %870 = vst.msk [vmem:[%s868] ss:$8 sm:$0x0] %vm867, 1.0
        %v871 = vld [vmem:[#allocation2] sm:$0xf]
        %v872 = vld [vmem:[#allocation2 + $0x8] sm:$0xf]
        %873 = vmatpush.xpose.msra.mxu0 %v790
        %874 = vmatpush.xpose.msra.mxu0 %v786
        %875 = vmatpush.xpose.msra.mxu0 %v782
        %876 = vmatpush.xpose.msra.mxu0 %v778
        %877 = vmatpush.xpose.msra.mxu0 %v774
        %878 = vmatpush.xpose.msra.mxu0 %v770
        %879 = vmatpush.xpose.msra.mxu0 %v766
        %880 = vmatpush.xpose.msra.mxu0 %v762
        %881 = vmatpush.xpose.msra.mxu0 %v758
        %882 = vmatpush.xpose.msra.mxu0 %v754
        %883 = vmatpush.xpose.msra.mxu0 %v750
        %884 = vmatpush.xpose.msra.mxu0 %v746
        %885 = vmatpush.xpose.msra.mxu0 %v742
        %886 = vmatpush.xpose.msra.mxu0 %v738
        %887 = vmatpush.xpose.msra.mxu0 %v734
        %888 = vmatpush.xpose.msra.mxu0 %v730
        %889 = vmatmul.f32.gmra.mxu0 %v871
        %v890 = vpop.f32.mrf.mxu0
        %v891 = vadd.f32 0.0, %v890
        %892 = vdwg.mxu0
        %893 = vmatpush.xpose.msra.mxu0 %v792
        %894 = vmatpush.xpose.msra.mxu0 %v788
        %895 = vmatpush.xpose.msra.mxu0 %v784
        %896 = vmatpush.xpose.msra.mxu0 %v780
        %897 = vmatpush.xpose.msra.mxu0 %v776
        %898 = vmatpush.xpose.msra.mxu0 %v772
        %899 = vmatpush.xpose.msra.mxu0 %v768
        %900 = vmatpush.xpose.msra.mxu0 %v764
        %901 = vmatpush.xpose.msra.mxu0 %v760
        %902 = vmatpush.xpose.msra.mxu0 %v756
        %903 = vmatpush.xpose.msra.mxu0 %v752
        %904 = vmatpush.xpose.msra.mxu0 %v748
        %905 = vmatpush.xpose.msra.mxu0 %v744
        %906 = vmatpush.xpose.msra.mxu0 %v740
        %907 = vmatpush.xpose.msra.mxu0 %v736
        %908 = vmatpush.xpose.msra.mxu0 %v732
        %909 = vmatmul.f32.gmra.mxu0 %v872
        %v910 = vpop.f32.mrf.mxu0
        %v911 = vadd.f32 %v891, %v910
        %912 = vdwg.mxu0
        %913 = vmatpush.xpose.msra.mxu0 %v854
        %914 = vmatpush.xpose.msra.mxu0 %v850
        %915 = vmatpush.xpose.msra.mxu0 %v846
        %916 = vmatpush.xpose.msra.mxu0 %v842
        %917 = vmatpush.xpose.msra.mxu0 %v838
        %918 = vmatpush.xpose.msra.mxu0 %v834
        %919 = vmatpush.xpose.msra.mxu0 %v830
        %920 = vmatpush.xpose.msra.mxu0 %v826
        %921 = vmatpush.xpose.msra.mxu0 %v822
        %922 = vmatpush.xpose.msra.mxu0 %v818
        %923 = vmatpush.xpose.msra.mxu0 %v814
        %924 = vmatpush.xpose.msra.mxu0 %v810
        %925 = vmatpush.xpose.msra.mxu0 %v806
        %926 = vmatpush.xpose.msra.mxu0 %v802
        %927 = vmatpush.xpose.msra.mxu0 %v798
        %928 = vmatpush.xpose.msra.mxu0 %v794
        %929 = vmatmul.f32.gmra.mxu0 %v871
        %v930 = vpop.f32.mrf.mxu0
        %v931 = vadd.f32 0.0, %v930
        %932 = vdwg.mxu0
        %933 = vmatpush.xpose.msra.mxu0 %v856
        %934 = vmatpush.xpose.msra.mxu0 %v852
        %935 = vmatpush.xpose.msra.mxu0 %v848
        %936 = vmatpush.xpose.msra.mxu0 %v844
        %937 = vmatpush.xpose.msra.mxu0 %v840
        %938 = vmatpush.xpose.msra.mxu0 %v836
        %939 = vmatpush.xpose.msra.mxu0 %v832
        %940 = vmatpush.xpose.msra.mxu0 %v828
        %941 = vmatpush.xpose.msra.mxu0 %v824
        %942 = vmatpush.xpose.msra.mxu0 %v820
        %943 = vmatpush.xpose.msra.mxu0 %v816
        %944 = vmatpush.xpose.msra.mxu0 %v812
        %945 = vmatpush.xpose.msra.mxu0 %v808
        %946 = vmatpush.xpose.msra.mxu0 %v804
        %947 = vmatpush.xpose.msra.mxu0 %v800
        %948 = vmatpush.xpose.msra.mxu0 %v796
        %949 = vmatmul.f32.gmra.mxu0 %v872
        %v950 = vpop.f32.mrf.mxu0
        %v951 = vadd.f32 %v931, %v950
        %952 = vdwg.mxu0
        %v953 = vrcp.pop %v911
        %v954 = vmul.f32 %v911, %v953
        %v955 = vsub.f32 1.0, %v954
        %v956 = vmul.f32 %v953, %v955
        %v957 = vadd.f32 %v953, %v956
        %vm958 = vweird.f32 %v911
        %vm959 = vweird.f32 %v953
        %vm960 = vmor %vm958, %vm959
        %v961 = vsel %vm960, %v953, %v957
        %v962 = vand.u32 2147483647, %v911
        %vm963 = vcmp.eq.f32.partialorder %v962, 8.507059e+37
        %v964 = vand.u32 %v911, 2147483648
        %v965 = vor.u32 1.1754944e-38, %v964
        %v966 = vsel %vm963, %v965, %v961
        %v967 = vrcp.pop %v951
        %v968 = vmul.f32 %v951, %v967
        %v969 = vsub.f32 1.0, %v968
        %v970 = vmul.f32 %v967, %v969
        %v971 = vadd.f32 %v967, %v970
        %vm972 = vweird.f32 %v951
        %vm973 = vweird.f32 %v967
        %vm974 = vmor %vm972, %vm973
        %v975 = vsel %vm974, %v967, %v971
        %v976 = vand.u32 2147483647, %v951
        %vm977 = vcmp.eq.f32.partialorder %v976, 8.507059e+37
        %v978 = vand.u32 %v951, 2147483648
        %v979 = vor.u32 1.1754944e-38, %v978
        %v980 = vsel %vm977, %v979, %v975
        %v981 = vperm.slane %v966, 3
        %v982 = vperm.slane %v980, 3
        %v983 = vmul.f32 %v911, %v981
        %v984 = vmul.f32 %v951, %v982
        %985 = vrot.lane.b32.xlu0 %v983, 17
        %v986 = vpop.permute.xlu0 %985
        %987 = vrot.lane.b32.xlu0 %v984, 17
        %v988 = vpop.permute.xlu0 %987
        %v989 = vlaneseq
        %v990 = vand.u32 %v989, 127
        %vm991 = vcmp.lt.s32.totalorder %v990, 17
        %v992 = vsel %vm991, %v986, %v988
        %v993 = vsel %vm991, %v988, %v986
        %v994 = vld [vmem:[#allocation3] ss:$8 sm:$0x3]
        %v996 = vperm.slane %v994, 0
        %v997 = vperm.slane %v994, 1
        %v1000 = vmul.f32 %v993, %v996
        %v1001 = vmul.f32 %v992, %v997
        %1002 = vst [vmem:[#allocation2] sm:$0x7] %v1000
        %1003 = vst [vmem:[#allocation2 + $0x8] sm:$0x7] %v1001
        %1004 = vrot.lane.b32.xlu0 %v983, 16
        %v1005 = vpop.permute.xlu0 %1004
        %1006 = vrot.lane.b32.xlu0 %v984, 16
        %v1007 = vpop.permute.xlu0 %1006
        %vm1008 = vcmp.lt.s32.totalorder %v990, 16
        %v1009 = vsel %vm1008, %v1005, %v1007
        %v1010 = vsel %vm1008, %v1007, %v1005
        %s1011 = scalar_lea.vmem [#allocation3], 1
        %v1012 = vld [vmem:[%s1011] ss:$8 sm:$0x3]
        %v1014 = vperm.slane %v1012, 0
        %v1015 = vperm.slane %v1012, 1
        %v1018 = vmul.f32 %v1010, %v1014
        %v1019 = vmul.f32 %v1009, %v1015
        %v1022 = vrot.slane %v1018, 5
        %v1023 = vrot.slane %v1019, 5
        %1026 = vst [vmem:[#allocation2] sm:$0x38] %v1022
        %1027 = vst [vmem:[#allocation2 + $0x8] sm:$0x38] %v1023
        %1028 = vrot.lane.b32.xlu0 %v983, 15
        %v1029 = vpop.permute.xlu0 %1028
        %1030 = vrot.lane.b32.xlu0 %v984, 15
        %v1031 = vpop.permute.xlu0 %1030
        %vm1032 = vcmp.lt.s32.totalorder %v990, 15
        %v1033 = vsel %vm1032, %v1029, %v1031
        %v1034 = vsel %vm1032, %v1031, %v1029
        %s1035 = scalar_lea.vmem [#allocation3], 2
        %v1036 = vld [vmem:[%s1035] ss:$8 sm:$0x3]
        %v1038 = vperm.slane %v1036, 0
        %v1039 = vperm.slane %v1036, 1
        %v1042 = vmul.f32 %v1034, %v1038
        %v1043 = vmul.f32 %v1033, %v1039
        %v1046 = vrot.slane %v1042, 2
        %v1047 = vrot.slane %v1043, 2
        %1050 = vst [vmem:[#allocation2] sm:$0xc0] %v1046
        %1051 = vst [vmem:[#allocation2 + $0x8] sm:$0xc0] %v1047
        %1052 = vst [vmem:[#allocation2 + $0x10] sm:$0x1] %v1046
        %1053 = vst [vmem:[#allocation2 + $0x18] sm:$0x1] %v1047
        %1054 = vrot.lane.b32.xlu0 %v983, 1
        %v1055 = vpop.permute.xlu0 %1054
        %1056 = vrot.lane.b32.xlu0 %v984, 1
        %v1057 = vpop.permute.xlu0 %1056
        %vm1058 = vcmp.lt.s32.totalorder %v990, 1
        %v1059 = vsel %vm1058, %v1055, %v1057
        %v1060 = vsel %vm1058, %v1057, %v1055
        %s1061 = scalar_lea.vmem [#allocation3], 3
        %v1062 = vld [vmem:[%s1061] ss:$8 sm:$0x3]
        %v1064 = vperm.slane %v1062, 0
        %v1065 = vperm.slane %v1062, 1
        %v1068 = vmul.f32 %v1060, %v1064
        %v1069 = vmul.f32 %v1059, %v1065
        %v1072 = vrot.slane %v1068, 7
        %v1073 = vrot.slane %v1069, 7
        %1076 = vst [vmem:[#allocation2 + $0x10] sm:$0xe] %v1072
        %1077 = vst [vmem:[#allocation2 + $0x18] sm:$0xe] %v1073
        %v1080 = vrot.slane %v983, 4
        %v1081 = vrot.slane %v984, 4
        %1084 = vst [vmem:[#allocation2 + $0x10] sm:$0x70] %v1080
        %1085 = vst [vmem:[#allocation2 + $0x18] sm:$0x70] %v1081
        %1086 = vrot.lane.b32.xlu0 %v983, 127
        %v1087 = vpop.permute.xlu0 %1086
        %1088 = vrot.lane.b32.xlu0 %v984, 127
        %v1089 = vpop.permute.xlu0 %1088
        %vm1090 = vcmp.lt.s32.totalorder %v990, 127
        %v1091 = vsel %vm1090, %v1087, %v1089
        %v1092 = vsel %vm1090, %v1089, %v1087
        %s1093 = scalar_lea.vmem [#allocation3], 5
        %v1094 = vld [vmem:[%s1093] ss:$8 sm:$0x3]
        %v1096 = vperm.slane %v1094, 0
        %v1097 = vperm.slane %v1094, 1
        %v1100 = vmul.f32 %v1091, %v1096
        %v1101 = vmul.f32 %v1092, %v1097
        %v1104 = vrot.slane %v1100, 1
        %v1105 = vrot.slane %v1101, 1
        %1108 = vst [vmem:[#allocation2 + $0x10] sm:$0x80] %v1104
        %1109 = vst [vmem:[#allocation2 + $0x18] sm:$0x80] %v1105
        %1110 = vst [vmem:[#allocation2 + $0x20] sm:$0x3] %v1104
        %1111 = vst [vmem:[#allocation2 + $0x28] sm:$0x3] %v1105
        %1112 = vrot.lane.b32.xlu0 %v983, 113
        %v1113 = vpop.permute.xlu0 %1112
        %1114 = vrot.lane.b32.xlu0 %v984, 113
        %v1115 = vpop.permute.xlu0 %1114
        %vm1116 = vcmp.lt.s32.totalorder %v990, 113
        %v1117 = vsel %vm1116, %v1113, %v1115
        %v1118 = vsel %vm1116, %v1115, %v1113
        %s1119 = scalar_lea.vmem [#allocation3], 6
        %v1120 = vld [vmem:[%s1119] ss:$8 sm:$0x3]
        %v1122 = vperm.slane %v1120, 0
        %v1123 = vperm.slane %v1120, 1
        %v1126 = vmul.f32 %v1117, %v1122
        %v1127 = vmul.f32 %v1118, %v1123
        %v1130 = vrot.slane %v1126, 6
        %v1131 = vrot.slane %v1127, 6
        %1134 = vst [vmem:[#allocation2 + $0x20] sm:$0x1c] %v1130
        %1135 = vst [vmem:[#allocation2 + $0x28] sm:$0x1c] %v1131
        %1136 = vrot.lane.b32.xlu0 %v983, 112
        %v1137 = vpop.permute.xlu0 %1136
        %1138 = vrot.lane.b32.xlu0 %v984, 112
        %v1139 = vpop.permute.xlu0 %1138
        %vm1140 = vcmp.lt.s32.totalorder %v990, 112
        %v1141 = vsel %vm1140, %v1137, %v1139
        %v1142 = vsel %vm1140, %v1139, %v1137
        %s1143 = scalar_lea.vmem [#allocation3], 7
        %v1144 = vld [vmem:[%s1143] ss:$8 sm:$0x3]
        %v1146 = vperm.slane %v1144, 0
        %v1147 = vperm.slane %v1144, 1
        %v1150 = vmul.f32 %v1141, %v1146
        %v1151 = vmul.f32 %v1142, %v1147
        %v1154 = vrot.slane %v1150, 3
        %v1155 = vrot.slane %v1151, 3
        %1158 = vst [vmem:[#allocation2 + $0x20] sm:$0xe0] %v1154
        %1159 = vst [vmem:[#allocation2 + $0x28] sm:$0xe0] %v1155
        %1160 = vrot.lane.b32.xlu0 %v983, 111
        %v1161 = vpop.permute.xlu0 %1160
        %1162 = vrot.lane.b32.xlu0 %v984, 111
        %v1163 = vpop.permute.xlu0 %1162
        %vm1164 = vcmp.lt.s32.totalorder %v990, 111
        %v1165 = vsel %vm1164, %v1161, %v1163
        %v1166 = vsel %vm1164, %v1163, %v1161
        %s1167 = scalar_lea.vmem [#allocation3], 16
        %v1168 = vld [vmem:[%s1167] ss:$8 sm:$0x3]
        %v1170 = vperm.slane %v1168, 0
        %v1171 = vperm.slane %v1168, 1
        %v1174 = vmul.f32 %v1165, %v1170
        %v1175 = vmul.f32 %v1166, %v1171
        %1176 = vst [vmem:[#allocation2 + $0x30] sm:$0x7] %v1174
        %1177 = vst [vmem:[#allocation2 + $0x38] sm:$0x7] %v1175
        %s1178 = scalar_lea.vmem [#allocation2], 51
        %1179 = vst.msk [vmem:[%s1178] ss:$8 sm:$0x3] %vm867, 1.0
        %1180 = vst.msk [vmem:[%s1178] ss:$8 sm:$0x0] %vm867, 1.0
        %1181 = vst [vmem:[#allocation2 + $0x30] sm:$0xf0] 0.0
        %1182 = vst [vmem:[#allocation2 + $0x38] sm:$0xf0] 0.0
        %v1183 = vld [vmem:[%s1] sm:$0x7]
        %v1184 = vld [vmem:[#allocation2] sm:$0xff]
        %v1185 = vld [vmem:[#allocation2 + $0x8] sm:$0xff]
        %v1186 = vld [vmem:[#allocation2 + $0x10] sm:$0xff]
        %v1187 = vld [vmem:[#allocation2 + $0x18] sm:$0xff]
        %v1188 = vld [vmem:[#allocation2 + $0x20] sm:$0xff]
        %v1189 = vld [vmem:[#allocation2 + $0x28] sm:$0xff]
        %v1190 = vld [vmem:[#allocation2 + $0x30] sm:$0xff]
        %v1191 = vld [vmem:[#allocation2 + $0x38] sm:$0xff]
        %vm1192 = vcmask 261120
        %v1194 = vsel %vm1192, %v1183, 0
        %1196 = vmatpush.msra.mxu0 0.0
        %1197 = vmatpush.msra.mxu0 0.0
        %1198 = vmatpush.msra.mxu0 0.0
        %1199 = vmatpush.msra.mxu0 0.0
        %1200 = vmatpush.msra.mxu0 0.0
        %1201 = vmatpush.msra.mxu0 0.0
        %1202 = vmatpush.msra.mxu0 0.0
        %1203 = vmatpush.msra.mxu0 0.0
        %1204 = vmatpush.msra.mxu0 0.0
        %1205 = vmatpush.msra.mxu0 0.0
        %1206 = vmatpush.msra.mxu0 0.0
        %1207 = vmatpush.msra.mxu0 0.0
        %1208 = vmatpush.msra.mxu0 %v1190
        %1209 = vmatpush.msra.mxu0 %v1188
        %1210 = vmatpush.msra.mxu0 %v1186
        %1211 = vmatpush.msra.mxu0 %v1184
        %1212 = vmatmul.f32.gmra.mxu0 %v1194
        %v1213 = vpop.f32.mrf.mxu0
        %v1214 = vadd.f32 0.0, %v1213
        %1215 = vdwg.mxu0
        %1216 = vmatpush.msra.mxu0 0.0
        %1217 = vmatpush.msra.mxu0 0.0
        %1218 = vmatpush.msra.mxu0 0.0
        %1219 = vmatpush.msra.mxu0 0.0
        %1220 = vmatpush.msra.mxu0 0.0
        %1221 = vmatpush.msra.mxu0 0.0
        %1222 = vmatpush.msra.mxu0 0.0
        %1223 = vmatpush.msra.mxu0 0.0
        %1224 = vmatpush.msra.mxu0 0.0
        %1225 = vmatpush.msra.mxu0 0.0
        %1226 = vmatpush.msra.mxu0 0.0
        %1227 = vmatpush.msra.mxu0 0.0
        %1228 = vmatpush.msra.mxu0 %v1191
        %1229 = vmatpush.msra.mxu0 %v1189
        %1230 = vmatpush.msra.mxu0 %v1187
        %1231 = vmatpush.msra.mxu0 %v1185
        %1232 = vmatmul.f32.gmra.mxu0 %v1194
        %v1233 = vpop.f32.mrf.mxu0
        %v1234 = vadd.f32 0.0, %v1233
        %1235 = vdwg.mxu0
        %v1238 = vrot.slane %v1234, 4
        %vm1239 = vcmask 1043456
        %v1240 = vsel %vm1239, %v1214, %v1238
        %v1242 = vadd.f32 %v188, %v1240
        %1243 = vst [vmem:[%s187] sm:$0x77] %v1242
        %p1244 = scmp.lt.s32.totalorder %s15, 1
        %s1245 = scalar_select %p1244, %s15, 1
        %s1246 = smul.addr %s1245, 2
        %s1247 = smul.addr %s1246, 4
        %s1248 = scalar_lea.vmem %s3, %s1247
        // Predicated region
        $region37: #{tpu_custom_call.1} parent=31 // pred_check
          %p1249 = pneg %p101
        $region38: #{tpu_custom_call.1} parent=31 // pred_check_branch
          %1251 = sbr.rel (%p1249) target = $region40
        $region39: #{tpu_custom_call.1} parent=31 // pred_region
          _
        $region40: #{tpu_custom_call.1} parent=31 // pred_fallthru
          _
      $region32: #{tpu_custom_call.1} parent=5 // pred_fallthru
        _
      %p1252 = scmp.le.s32.totalorder 2, %s10
      // Predicated region
      $region41: #{tpu_custom_call.1} parent=5 // pred_check
        %p1253 = pneg %p1252
      $region42: #{tpu_custom_call.1} parent=5 // pred_check_branch
        %1255 = sbr.rel (%p1253) target = $region44
      $region43: #{tpu_custom_call.1} parent=5 // pred_region
        %s1256 = ssub.s32 %s10, 2
        // Predicated region
        $region45: #{tpu_custom_call.1} parent=43 // pred_check
          %p1257 = pneg %p107
        $region46: #{tpu_custom_call.1} parent=43 // pred_check_branch
          %1259 = sbr.rel (%p1257) target = $region48
        $region47: #{tpu_custom_call.1} parent=43 // pred_region
          %p1260 = scmp.lt.s32.totalorder %s16, 1
          %s1261 = scalar_select %p1260, %s16, 1
          %s1262 = smul.addr %s1261, 2
          %s1263 = smul.addr %s1262, 4
          %s1264 = scalar_lea.vmem %s3, %s1263
        $region48: #{tpu_custom_call.1} parent=43 // pred_fallthru
          _
      $region44: #{tpu_custom_call.1} parent=5 // pred_fallthru
        _
    $region6: #{tpu_custom_call.1} parent=1 // loop_footer
      %s14 = sadd.s32 1, %s10
    $region7: #{tpu_custom_call.1} parent=1 // loop_footer_branch
      %9 = sbr.rel target = $region3
    $region8: #{tpu_custom_call.1} parent=1 // loop_exit
      _
    %1265 = vsyncpa [#allocation4], 1
    %s1266 = scalar_lea.sflag [#allocation4], 1
    %1267 = vsyncpa %s1266, 1

</llo_original>
